<compile_context>
chip_gen: v6e
topology: v6e:2x2x1
jax: 0.10.0
libtpu: 0.0.40
codegen_flags: <defaults>
</compile_context>

<pallas_src>
import functools
import math

import jax
import jax.numpy as jnp
from jax.experimental import pallas as pl
from jax.experimental.pallas import tpu as pltpu

_EPS = 1e-15                              # matches the torch implementation
_MAX_NLL = float(-math.log(_EPS))         # upper clamp; lower clamp -log(1 - eps) == 0 in f32
_TARGET_TILE_BYTES = 2 * 1024 * 1024      # logits bytes per grid step
_VMEM_BUDGET_BYTES = 24 * 1024 * 1024     # 2x input buffers + ~6 f32 temporaries
_VMEM_LIMIT_BYTES = 32 * 1024 * 1024      # explicit scoped-VMEM limit for all generations
_HIGHEST = jax.lax.Precision.HIGHEST


def _round_up(x: int, m: int) -> int:
    return (x + m - 1) // m * m


def _pack_factor(num_classes: int) -> int:
    """Rows packed per 128-lane vreg row (1 = no packing)."""
    if 0 < num_classes < 128 and 128 % num_classes == 0:
        return 128 // num_classes
    return 1


def _choose_tm(num_rows: int, row_width: int, itemsize: int) -> int:
    # ~2 MiB of logits per tile: large enough to amortize the ~0.35us/grid-step
    # overhead, small enough (double-buffered + f32 temporaries) for every
    # generation's VMEM, including v7x's 64 MiB.
    tm = _TARGET_TILE_BYTES // max(1, row_width * itemsize)
    per_row_vmem = row_width * (2 * itemsize + 6 * 4)
    tm = min(tm, _VMEM_BUDGET_BYTES // max(1, per_row_vmem))
    if num_rows > 8:
        # Keep >=2 grid steps so the "parallel" axis can split across v7x's 2 TCs.
        tm = min(tm, _round_up((num_rows + 1) // 2, 8))
    tm = min(tm, _round_up(num_rows, 8))
    return max(8, (tm // 8) * 8)


@functools.lru_cache(maxsize=None)
def _pltpu_roll_matches_numpy() -> bool:
    """One-time probe of pltpu.roll's rotation direction on this backend."""
    def probe(x_ref, o_ref):
        o_ref[...] = pltpu.roll(x_ref[...], 1, axis=1)

    x = jnp.tile(jnp.arange(128, dtype=jnp.float32), (8, 1))
    y = pl.pallas_call(probe, out_shape=jax.ShapeDtypeStruct((8, 128), jnp.float32))(x)
    # np.roll convention: out[j] == in[(j - shift) % n]  ->  out[0] == 127.
    return bool(y[0, 0] == 127.0)


def _packed_kernel(x_ref, lab_ref, *rest, num_classes, pack, weighted,
                   partial_sum, roll_np):
    """Lane-packed path: each kernel row holds `pack` original rows of
    `num_classes` logits (pack * num_classes == 128)."""
    c, k = num_classes, pack
    if weighted:
        cw_ref, out_ref = rest            # cw_ref: (1, 128) class weights tiled k times
    else:
        (out_ref,) = rest

    x = x_ref[...].astype(jnp.float32)    # (tm, 128)
    lab = lab_ref[...]                    # (tm, k) int32, -1 marks padding rows
    lanes = x.shape[1]

    # ---- exact per-segment max (segments of length c along lanes) -----------
    # Circular doubling: after log2(c) steps every lane holds its segment max.
    off = jax.lax.broadcasted_iota(jnp.int32, x.shape, 1) & (c - 1)
    m = x
    s = 1
    while s < c:
        if roll_np:                       # roll(x, r)[j] == x[(j - r) % lanes]
            fwd = pltpu.roll(m, lanes - s, axis=1)        # segment offset o + s
            wrap = pltpu.roll(m, c - s, axis=1)           # segment offset o + s - c
        else:                             # roll(x, r)[j] == x[(j + r) % lanes]
            fwd = pltpu.roll(m, s, axis=1)
            wrap = pltpu.roll(m, lanes - (c - s), axis=1)
        m = jnp.maximum(m, jnp.where(off < c - s, fwd, wrap))
        s *= 2

    ez = jnp.exp(x - m)                   # lane-dense EUP work

    # Block-diagonal segment matrices (tiny constants built from iota).
    lane_r = jax.lax.broadcasted_iota(jnp.int32, (lanes, k), 0)
    seg_c = jax.lax.broadcasted_iota(jnp.int32, (lanes, k), 1) * c
    compact = ((lane_r >= seg_c) & (lane_r < seg_c + c)).astype(jnp.float32)   # (128, k)
    seg_r = jax.lax.broadcasted_iota(jnp.int32, (k, lanes), 0) * c
    lane_c = jax.lax.broadcasted_iota(jnp.int32, (k, lanes), 1)
    expand = ((lane_c >= seg_r) & (lane_c < seg_r + c)).astype(jnp.float32)    # (k, 128)

    # Per-row softmax denominator and per-row max, compacted to (tm, k) on the MXU.
    denom = jnp.dot(ez, compact, preferred_element_type=jnp.float32,
                    precision=_HIGHEST)                                        # (tm, k)
    m_rows = jnp.dot(m, compact, preferred_element_type=jnp.float32,
                     precision=_HIGHEST) * (1.0 / c)                           # (tm, k)

    # One-hot of the true-class lane: expand labels to lanes via the MXU.
    seg_idx = jax.lax.broadcasted_iota(jnp.int32, (x.shape[0], k), 1)
    target = jnp.where(lab >= 0, lab + seg_idx * c, -1).astype(jnp.float32)    # (tm, k)
    target_full = jnp.dot(target, expand, preferred_element_type=jnp.float32,
                          precision=_HIGHEST)                                  # (tm, 128)
    col = jax.lax.broadcasted_iota(jnp.int32, x.shape, 1).astype(jnp.float32)
    sel = col == target_full                                                   # (tm, 128)

    x_true = jnp.dot(jnp.where(sel, x, 0.0), compact,
                     preferred_element_type=jnp.float32, precision=_HIGHEST)   # (tm, k)

    nll = jnp.clip(m_rows + jnp.log(denom) - x_true, 0.0, _MAX_NLL)            # (tm, k)
    if weighted:
        w = jnp.dot(jnp.where(sel, cw_ref[...].astype(jnp.float32), 0.0), compact,
                    preferred_element_type=jnp.float32, precision=_HIGHEST)
        nll = nll * w
    nll = jnp.where(lab >= 0, nll, 0.0)                                        # zero padded rows

    if partial_sum:
        tile_sum = jnp.sum(jnp.sum(nll, axis=1, keepdims=True), axis=0,
                           keepdims=True)                                      # (1, 1)
        out_ref[...] = jnp.broadcast_to(tile_sum[None, :, :], (1, 8, 128))
    else:
        out_ref[...] = nll


def _rowwise_kernel(x_ref, lab_ref, *rest, weighted, partial_sum):
    """General path (any class count): classes on lanes, one row per sublane."""
    if weighted:
        cw_ref, out_ref = rest            # cw_ref: (1, C)
    else:
        (out_ref,) = rest
    x = x_ref[...].astype(jnp.float32)    # (tm, C)
    lab = lab_ref[...]                    # (tm, 1) int32, -1 marks padding rows
    tm, c = x.shape

    col = jax.lax.broadcasted_iota(jnp.int32, (tm, c), 1)
    onehot = col == lab
    m = jnp.max(x, axis=-1, keepdims=True)
    ez = jnp.exp(x - m)
    denom = jnp.sum(ez, axis=-1, keepdims=True)
    x_true = jnp.sum(jnp.where(onehot, x, 0.0), axis=-1, keepdims=True)
    nll = jnp.clip(m + jnp.log(denom) - x_true, 0.0, _MAX_NLL)
    if weighted:
        w = jnp.sum(jnp.where(onehot, cw_ref[...].astype(jnp.float32), 0.0),
                    axis=-1, keepdims=True)
        nll = nll * w
    nll = jnp.where(lab >= 0, nll, 0.0)

    if partial_sum:
        tile_sum = jnp.sum(nll, axis=0, keepdims=True)                          # (1, 1)
        out_ref[...] = jnp.broadcast_to(tile_sum[None, :, :], (1, 8, 128))
    else:
        out_ref[...] = nll


@functools.partial(jax.jit, static_argnames=("reduction", "roll_np"))
def _cll_impl(y_pred, y_true, class_weights, *, reduction, roll_np):
    batch, num_classes = y_pred.shape
    labels = y_true.reshape(batch).astype(jnp.int32)
    weighted = class_weights is not None
    itemsize = jnp.dtype(y_pred.dtype).itemsize
    partial_sum = reduction != "none"

    pack = _pack_factor(num_classes)
    row_width = num_classes * pack
    rows = pl.cdiv(batch, pack)
    tm = _choose_tm(rows, row_width, itemsize)
    rows_p = _round_up(rows, tm)
    padded = rows_p * pack
    grid = rows_p // tm

    if padded != batch:
        y_pred = jnp.pad(y_pred, ((0, padded - batch), (0, 0)))
        labels = jnp.pad(labels, (0, padded - batch), constant_values=-1)

    x_in = y_pred.reshape(rows_p, row_width)          # free row-major reshape
    lab_in = labels.reshape(rows_p, pack)

    inputs = [x_in, lab_in]
    in_specs = [pl.BlockSpec((tm, row_width), lambda i: (i, 0)),
                pl.BlockSpec((tm, pack), lambda i: (i, 0))]
    if weighted:
        cw = jnp.asarray(class_weights, jnp.float32).reshape(1, num_classes)
        cw = jnp.tile(cw, (1, pack))                  # lane j -> class j % num_classes
        inputs.append(cw)
        in_specs.append(pl.BlockSpec((1, row_width), lambda i: (0, 0)))

    if partial_sum:
        out_shape = jax.ShapeDtypeStruct((grid, 8, 128), jnp.float32)
        out_specs = pl.BlockSpec((1, 8, 128), lambda i: (i, 0, 0))
        out_bytes = grid * 8 * 128 * 4
    else:
        out_shape = jax.ShapeDtypeStruct((rows_p, pack), jnp.float32)
        out_specs = pl.BlockSpec((tm, pack), lambda i: (i, 0))
        out_bytes = rows_p * pack * 4

    if pack > 1:
        kernel = functools.partial(_packed_kernel, num_classes=num_classes,
                                   pack=pack, weighted=weighted,
                                   partial_sum=partial_sum, roll_np=roll_np)
    else:
        kernel = functools.partial(_rowwise_kernel, weighted=weighted,
                                   partial_sum=partial_sum)

    cost = pl.CostEstimate(
        flops=12 * padded * num_classes,
        transcendentals=padded * num_classes + padded,
        bytes_accessed=(padded * num_classes * itemsize + padded * 4 + out_bytes
                        + (row_width * 4 if weighted else 0)),
    )

    out = pl.pallas_call(
        kernel,
        out_shape=out_shape,
        grid_spec=pltpu.PrefetchScalarGridSpec(
            num_scalar_prefetch=0,
            grid=(grid,),
            in_specs=in_specs,
            out_specs=out_specs,
        ),
        compiler_params=pltpu.CompilerParams(
            dimension_semantics=("parallel",),
            vmem_limit_bytes=_VMEM_LIMIT_BYTES,
        ),
        cost_estimate=cost,
    )(*inputs)

    if reduction == "none":
        return out.reshape(padded, 1)[:batch]
    total = jnp.sum(out[:, 0, 0])
    if reduction == "sum":
        return total
    return total / batch                               # elementwise_mean


def cumulative_link_loss(y_pred, y_true, class_weights=None,
                         reduction="elementwise_mean"):
    """Pallas-TPU CumulativeLinkLoss.forward.
    y_pred: (B, C) logits, y_true: (B,) or (B, 1) int class ids,
    class_weights: optional (C,)."""
    if reduction not in ("elementwise_mean", "sum", "none"):
        raise ValueError(f"{reduction} is not a valid reduction")
    roll_np = (_pltpu_roll_matches_numpy()
               if _pack_factor(y_pred.shape[1]) > 1 else True)
    return _cll_impl(y_pred, y_true, class_weights, reduction=reduction,
                     roll_np=roll_np)


def cumulative_link_loss_ref(y_pred, y_true, class_weights=None,
                             reduction="elementwise_mean"):
    """Pure-JAX reference matching the PyTorch module."""
    p = jax.nn.softmax(y_pred, axis=1)
    if y_true.ndim == 1:
        y_true = y_true[:, None]
    lik = jnp.clip(jnp.take_along_axis(p, y_true, axis=1), _EPS, 1.0 - _EPS)
    nll = -jnp.log(lik)
    if class_weights is not None:
        cw = jnp.asarray(class_weights, nll.dtype)
        nll = nll * cw[y_true]
    if reduction == "elementwise_mean":
        return nll.mean()
    if reduction == "sum":
        return nll.sum()
    if reduction == "none":
        return nll
    raise ValueError(f"{reduction} is not a valid reduction")


if __name__ == "__main__":
    def check(batch, num_classes, reduction, use_weights, key):
        k1, k2, k3 = jax.random.split(key, 3)
        y_pred = jax.random.normal(k1, (batch, num_classes), dtype=jnp.float32)
        y_true = jax.random.randint(k2, (batch,), 0, num_classes, dtype=jnp.int32)
        cw = (jax.random.uniform(k3, (num_classes,), jnp.float32, 0.5, 1.5)
              if use_weights else None)
        got = jax.block_until_ready(
            cumulative_link_loss(y_pred, y_true, cw, reduction=reduction))
        want = cumulative_link_loss_ref(y_pred, y_true, cw, reduction=reduction)
        assert got.shape == want.shape, (got.shape, want.shape)
        assert jnp.allclose(got, want, atol=2e-5, rtol=2e-5), \
            (batch, num_classes, reduction, use_weights, got, want)

    keys = jax.random.split(jax.random.PRNGKey(0), 5)
    check(8, 16, "elementwise_mean", False, keys[0])    # packed path, unweighted, mean
    check(8, 16, "none", True, keys[1])                 # packed path, weighted, per-sample
    check(600, 16, "elementwise_mean", True, keys[2])   # packed path, multi-tile grid + padding
    check(16, 20, "sum", True, keys[3])                 # row-wise path (128 % C != 0), weighted
    check(16, 20, "none", False, keys[4])               # row-wise path, per-sample
    print("KERNEL_OK")
</pallas_src>

<mosaic_0001>
module attributes {stable_mosaic.version = 11 : i64} {
  func.func @probe(%arg0: memref<8x128xf32, #tpu.memory_space<vmem>>, %arg1: memref<8x128xf32, #tpu.memory_space<vmem>>) attributes {dimension_semantics = [], scalar_prefetch = 0 : i64, scratch_operands = 0 : i64, tpu.core_type = #tpu.core_type<tc>} {
    %c0 = arith.constant 0 : index
    %c0_0 = arith.constant 0 : index
    %0 = vector.load %arg0[%c0, %c0_0] : memref<8x128xf32, #tpu.memory_space<vmem>>, vector<8x128xf32>
    %c1_i32 = arith.constant 1 : i32
    %1 = tpu.dynamic_rotate %0 by %c1_i32 dim 1 : vector<8x128xf32>, i32 -> vector<8x128xf32>
    %c0_1 = arith.constant 0 : index
    %c0_2 = arith.constant 0 : index
    %2 = vector.load %arg1[%c0_1, %c0_2] : memref<8x128xf32, #tpu.memory_space<vmem>>, vector<8x128xf32>
    tpu.vector_store %arg1[%c0_1, %c0_2], %1 {strides = array<i32>} : memref<8x128xf32, #tpu.memory_space<vmem>>, vector<8x128xf32>,
    return
  }
}

</mosaic_0001>

<llo_original>
// kernel: tpu_custom_call.1
$region0: #{tpu_custom_call.1}
  #allocation0 [shape = 'u32[]', space=smem, size = 0x4, offset = 0x4, fixed_abs, tag = 'smem constant byte address 0x4 - core index']
  #allocation1 [shape = 'u32[144,128]{1,0:T(1,128)}', space=vmem, size = 0x12000, scoped, tag = 'internal scratch']
  %s0 = inlined_call_operand.hbm [shape: f32[8,128], index: 0, kind: input, shape index: {}]
  %s1 = inlined_call_operand.hbm [shape: f32[8,128], index: 1, kind: output, shape index: {}]
  %s2 = sld [smem:[#allocation0]]
  $region18: #{tpu_custom_call.1} parent=0
    _
  %s4 = ssub.s32 1, %s2
  %s5 = scalar_select 0, %s4, %s2
  $region1: #{tpu_custom_call.1} parent=0
    #allocation2 [shape = 'u8[4096]{0}', space=vmem, size = 0x1000, scoped, tag = 'input window, operand 0, single buffered']
    #allocation3 [shape = 's32[1]{0}', space=sflag, size = 0x4, scoped, tag = 'scoped memory for tpu_custom_call.1']
    #allocation4 [shape = 's32[1]{0}', space=sflag, size = 0x4, scoped, tag = 'scoped memory for tpu_custom_call.1']
    #allocation5 [shape = 'u8[4096]{0}', space=vmem, size = 0x1000, scoped, tag = 'output window, operand 0, single buffered']
    %6 = vsyncpa [#allocation3], 0
    %7 = vsyncpa [#allocation4], 0
    // Predicated region
    $region2: #{tpu_custom_call.1} parent=1 // pred_check
      _
    $region3: #{tpu_custom_call.1} parent=1 // pred_check_branch
      %9 = sbr.rel (0) target = $region5
    $region4: #{tpu_custom_call.1} parent=1 // pred_region
      %s11 = ssub.s32 128, 128
      %12 = vsyncadd [#allocation3], %s11
      %s14 = sshll.u32 [#allocation2], 4
      %s15 = int_to_ptr.vmem [resolvable:$true] %s14
      %17 = dma.hbm_to_vmem [thread:$0]  %s0, 128, %s15, [#allocation3]
    $region5: #{tpu_custom_call.1} parent=1 // pred_fallthru
      _
    // Predicated region
    $region6: #{tpu_custom_call.1} parent=1 // pred_check
      _
    $region7: #{tpu_custom_call.1} parent=1 // pred_check_branch
      %19 = sbr.rel (0) target = $region9
    $region8: #{tpu_custom_call.1} parent=1 // pred_region
      %20 = dma.done [#allocation3], 128
    $region9: #{tpu_custom_call.1} parent=1 // pred_fallthru
      _
    %v21 = vld [vmem:[#allocation2] sm:$0xff]
    %22 = vrot.lane.b32.xlu0 %v21, 1
    %v23 = vpop.permute.xlu0 %22
    %24 = vst [vmem:[#allocation5] sm:$0xff] %v23
    // Predicated region
    $region10: #{tpu_custom_call.1} parent=1 // pred_check
      _
    $region11: #{tpu_custom_call.1} parent=1 // pred_check_branch
      %26 = sbr.rel (0) target = $region13
    $region12: #{tpu_custom_call.1} parent=1 // pred_region
      %s28 = ssub.s32 128, 128
      %29 = vsyncadd [#allocation4], %s28
      %s31 = sshll.u32 [#allocation5], 4
      %s32 = int_to_ptr.vmem [resolvable:$true] %s31
      %34 = dma.vmem_to_hbm [thread:$0]  %s32, 128, %s1, [#allocation4]
    $region13: #{tpu_custom_call.1} parent=1 // pred_fallthru
      _
    // Predicated region
    $region14: #{tpu_custom_call.1} parent=1 // pred_check
      _
    $region15: #{tpu_custom_call.1} parent=1 // pred_check_branch
      %36 = sbr.rel (0) target = $region17
    $region16: #{tpu_custom_call.1} parent=1 // pred_region
      %37 = dma.done [#allocation4], 128
    $region17: #{tpu_custom_call.1} parent=1 // pred_fallthru
      _
    %38 = vsyncpa [#allocation3], 1
    %39 = vsyncpa [#allocation4], 1

</llo_original>
